<compile_context>
chip_gen: v5e
topology: v5e:2x2
jax: 0.10.0
libtpu: 0.0.40
codegen_flags: <defaults>
</compile_context>

<pallas_src>
import jax
import jax.numpy as jnp
from jax.experimental import pallas as pl
from jax.experimental.pallas import tpu as pltpu


def _round_up(v, m):
    return ((v + m - 1) // m) * m


def _pick_tile(requested, n_pad, step):
    """Largest multiple of `step` <= requested that divides n_pad."""
    t = max(step, min(requested, n_pad))
    t = (t // step) * step
    while n_pad % t != 0:
        t -= step
    return t


def _default_vmem_limit_bytes():
    cap = 64 * 1024 * 1024
    try:
        info = pltpu.get_tpu_info()
        cap = int(getattr(info, "vmem_capacity_bytes", cap))
    except Exception:
        pass
    # 3/4 of physical VMEM, capped at 100 MiB (v5e/v6e: 96 MiB, v7x: 48 MiB).
    return int(min(cap * 3 // 4, 100 * 1024 * 1024))


# ---------------------------------------------------------------------------
# Kernel 1: projection  hp = x @ W_aug   (h, a_dst, a_src in one MXU pass)
# ---------------------------------------------------------------------------
def _proj_kernel(x_ref, w_ref, hp_ref):
    hp_ref[...] = jnp.dot(x_ref[...], w_ref[...],
                          preferred_element_type=jnp.float32)


# ---------------------------------------------------------------------------
# Kernel 2: masked softmax + aggregation, accumulated over src tiles
# ---------------------------------------------------------------------------
def _make_attn_kernel(tk, denom_col, h_resident):
    def kernel(a_dst_ref, a_src_ref, m_ref, adj_ref, h_ref, bias_ref, out_ref):
        j = pl.program_id(1)

        @pl.when(j == 0)
        def _init():
            out_ref[...] = jnp.zeros_like(out_ref)

        mask = adj_ref[...] > 0                       # [tm, tk] from int8 stream
        e = a_dst_ref[...] + a_src_ref[...]           # [tm,1]+[1,tk] -> [tm,tk]
        e = jnp.maximum(e, 0.2 * e)                   # leaky_relu(0.2)
        e = jnp.where(mask, e, -1e30)
        # m is a finite per-row upper bound of every logit in the row, so
        # masked lanes underflow to exactly 0.0 -> no second mask select.
        p = jnp.exp(e - m_ref[...])

        if h_resident:
            start = pl.multiple_of(j * tk, 128)
            h_blk = h_ref[pl.ds(start, tk), :]        # [tk, f_pad] bf16, resident
        else:
            h_blk = h_ref[...]                        # [tk, f_pad] bf16, streamed

        # The ones column of h makes out[:, denom_col] accumulate sum_j p for
        # free inside the same MXU pass (no XLU row reduction).
        out_ref[...] += jnp.dot(p.astype(h_blk.dtype), h_blk,
                                preferred_element_type=jnp.float32)

        @pl.when(j == pl.num_programs(1) - 1)
        def _finalize():
            acc = out_ref[...]
            l = acc[:, denom_col:denom_col + 1]       # softmax denominator
            l_safe = jnp.where(l > 0.0, l, 1.0)       # fully-masked padded rows
            out_ref[...] = acc * (1.0 / l_safe) + bias_ref[...]

    return kernel


# ---------------------------------------------------------------------------
# Wrapper
# ---------------------------------------------------------------------------
def gat_layer_forward(x, edge_index, w, att_src, att_dst, bias, *,
                      tm=512, tk=1024, vmem_limit_bytes=None):
    """GATConv(heads=1, concat=True) forward.

    x: [N, F_in] f32; edge_index: [2, E] int32 (row 0 = src, row 1 = dst);
    w: [F_in, F_out]; att_src / att_dst / bias: [1, F_out].
    (PyG stores lin.weight as [F_out, F_in]; caller must transpose when porting.)
    """
    N, f_in = x.shape
    f_out = w.shape[1]
    lane = 128

    if vmem_limit_bytes is None:
        vmem_limit_bytes = _default_vmem_limit_bytes()

    # --- tile sizes / padded shapes -----------------------------------------
    n_pad = _round_up(N, lane)
    tk = _pick_tile(tk, n_pad, lane)              # src tile (lanes)
    tm = _pick_tile(tm, n_pad, 32)                # dst tile (int8 sublane tiling)
    f_pad = _round_up(max(f_out + 3, lane), lane)  # h | a_dst | a_src | ones
    denom_col = f_out + 2

    # --- glue (plain XLA): padding, folded weights, dense int8 adjacency ----
    x_p = jnp.zeros((n_pad, f_in), jnp.float32).at[:N].set(x)

    w_aug = jnp.zeros((f_in, f_pad), jnp.float32)
    w_aug = w_aug.at[:, :f_out].set(w)
    w_aug = w_aug.at[:, f_out].set(w @ att_dst[0])        # a_dst column
    w_aug = w_aug.at[:, f_out + 1].set(w @ att_src[0])    # a_src column

    bias_p = jnp.zeros((1, f_pad), jnp.float32).at[:, :f_out].set(bias)

    # TODO(synk): for sparse graphs, build per-dst-tile compacted lists of
    #             non-empty src tiles and drive the j axis via scalar prefetch.
    src, dst = edge_index[0], edge_index[1]
    adj = jnp.zeros((n_pad, n_pad), jnp.int8)
    adj = adj.at[dst, src].set(1)                         # edge j -> i : adj[i, j]=1
    diag = jnp.arange(N)
    adj = adj.at[diag, diag].set(1)                       # self loops

    # --- kernel 1: projection ------------------------------------------------
    hp = pl.pallas_call(
        _proj_kernel,
        out_shape=jax.ShapeDtypeStruct((n_pad, f_pad), jnp.float32),
        grid_spec=pltpu.PrefetchScalarGridSpec(
            num_scalar_prefetch=0,
            grid=(n_pad // tm,),
            in_specs=[pl.BlockSpec((tm, f_in), lambda i: (i, 0)),
                      pl.BlockSpec((f_in, f_pad), lambda i: (0, 0))],
            out_specs=pl.BlockSpec((tm, f_pad), lambda i: (i, 0))),
        compiler_params=pltpu.CompilerParams(
            dimension_semantics=("parallel",),
            vmem_limit_bytes=vmem_limit_bytes),
    )(x_p, w_aug)

    # --- glue: attention scalars, exact per-row max bound, bf16 h stream ----
    a_dst = hp[:, f_out:f_out + 1]                        # [n_pad, 1] f32
    a_src_row = hp[:, f_out + 1:f_out + 2].T              # [1, n_pad] f32
    a_src_max = jnp.max(hp[:N, f_out + 1])                # over real nodes only
    z = a_dst + a_src_max
    m = jnp.maximum(z, 0.2 * z)                           # leaky_relu -> exact bound

    h_agg = hp.at[:, denom_col].set(1.0).astype(jnp.bfloat16)   # [n_pad, f_pad]

    # --- kernel 2: attention + aggregation -----------------------------------
    grid = (n_pad // tm, n_pad // tk)
    h_resident = n_pad * f_pad * 2 <= 8 * 1024 * 1024     # bf16 full-h footprint
    if h_resident:
        h_spec = pl.BlockSpec((n_pad, f_pad), lambda i, j: (0, 0))
    else:
        h_spec = pl.BlockSpec((tk, f_pad), lambda i, j: (j, 0))

    h_bytes = (n_pad * f_pad * 2) if h_resident else (grid[0] * n_pad * f_pad * 2)
    flops = 2 * n_pad * n_pad * f_pad + 6 * n_pad * n_pad
    bytes_accessed = (n_pad * n_pad                       # int8 adjacency
                      + h_bytes                           # bf16 h
                      + n_pad * f_pad * 4                 # f32 output
                      + 4 * n_pad * 4)                    # a_dst / a_src / m

    out_p = pl.pallas_call(
        _make_attn_kernel(tk, denom_col, h_resident),
        out_shape=jax.ShapeDtypeStruct((n_pad, f_pad), jnp.float32),
        grid_spec=pltpu.PrefetchScalarGridSpec(
            num_scalar_prefetch=0,
            grid=grid,
            in_specs=[
                pl.BlockSpec((tm, 1), lambda i, j: (i, 0)),       # a_dst (column)
                pl.BlockSpec((1, tk), lambda i, j: (0, j)),       # a_src (row)
                pl.BlockSpec((tm, 1), lambda i, j: (i, 0)),       # per-row max bound
                pl.BlockSpec((tm, tk), lambda i, j: (i, j)),      # adj tile (int8)
                h_spec,                                           # h (bf16)
                pl.BlockSpec((1, f_pad), lambda i, j: (0, 0)),    # bias
            ],
            out_specs=pl.BlockSpec((tm, f_pad), lambda i, j: (i, 0))),
        compiler_params=pltpu.CompilerParams(
            dimension_semantics=("parallel", "arbitrary"),
            vmem_limit_bytes=vmem_limit_bytes),
        cost_estimate=pl.CostEstimate(
            flops=flops,
            transcendentals=n_pad * n_pad,
            bytes_accessed=bytes_accessed),
    )(a_dst, a_src_row, m, adj, h_agg, bias_p)

    return out_p[:N, :f_out]


if __name__ == "__main__":
    # Small deterministic example: N=16 nodes, in_feats=8, out_feats=32, heads=1.
    N, F_IN, F_OUT, E = 16, 8, 32, 40
    key = jax.random.PRNGKey(0)
    kx, ke1, ke2, kw, ks, kd, kb = jax.random.split(key, 7)

    x = jax.random.normal(kx, (N, F_IN), dtype=jnp.float32)
    src = jax.random.randint(ke1, (E,), 0, N, dtype=jnp.int32)
    dst = jax.random.randint(ke2, (E,), 0, N, dtype=jnp.int32)
    edge_index = jnp.stack([src, dst], axis=0)                       # [2, E]

    # Parameters (shapes match GATConv(F_IN, F_OUT, heads=1); W is [F_in, F_out]).
    w = jax.random.normal(kw, (F_IN, F_OUT), dtype=jnp.float32) * 0.1
    att_src = jax.random.normal(ks, (1, F_OUT), dtype=jnp.float32) * 0.1
    att_dst = jax.random.normal(kd, (1, F_OUT), dtype=jnp.float32) * 0.1
    bias = jax.random.normal(kb, (1, F_OUT), dtype=jnp.float32) * 0.1

    out = gat_layer_forward(x, edge_index, w, att_src, att_dst, bias)
    out = jax.block_until_ready(out)
    assert out.shape == (N, F_OUT) and out.dtype == jnp.float32

    # Pure-JAX reference (same dense adjacency + self-loop construction).
    adj = jnp.zeros((N, N), jnp.float32).at[dst, src].set(1.0)
    adj = adj.at[jnp.arange(N), jnp.arange(N)].set(1.0)
    h = x @ w
    e = (h @ att_dst[0])[:, None] + (h @ att_src[0])[None, :]
    e = jnp.where(e >= 0, e, 0.2 * e)
    e = jnp.where(adj > 0, e, -jnp.inf)
    ref = jax.nn.softmax(e, axis=-1) @ h + bias
    assert jnp.allclose(out, ref, rtol=2e-2, atol=2e-2), \
        float(jnp.max(jnp.abs(out - ref)))
    print("KERNEL_OK")
</pallas_src>

<mosaic_0001>
module attributes {stable_mosaic.version = 11 : i64} {
  func.func @_proj_kernel(%arg0: i32, %arg1: memref<128x8xf32, #tpu.memory_space<vmem>>, %arg2: memref<8x128xf32, #tpu.memory_space<vmem>>, %arg3: memref<128x128xf32, #tpu.memory_space<vmem>>) attributes {dimension_semantics = [#tpu.dimension_semantics<parallel>], iteration_bounds = array<i64: 1>, scalar_prefetch = 0 : i64, scratch_operands = 0 : i64, tpu.core_type = #tpu.core_type<tc>, window_params = [{transform_indices = @transform_0, window_bounds = array<i64: 128, 8>}, {pipeline_mode = #tpu.pipeline_mode<synchronous>, transform_indices = @transform_1, window_bounds = array<i64: 8, 128>}, {transform_indices = @transform_2, window_bounds = array<i64: 128, 128>}]} {
    %c0 = arith.constant 0 : index
    %c0_0 = arith.constant 0 : index
    %0 = vector.load %arg1[%c0, %c0_0] : memref<128x8xf32, #tpu.memory_space<vmem>>, vector<128x8xf32>
    %c0_1 = arith.constant 0 : index
    %c0_2 = arith.constant 0 : index
    %1 = vector.load %arg2[%c0_1, %c0_2] : memref<8x128xf32, #tpu.memory_space<vmem>>, vector<8x128xf32>
    %cst = arith.constant dense<0.000000e+00> : vector<128x128xf32>
    %2 = tpu.matmul %0, %1, %cst {dimension_numbers = #tpu.dot_dimension_numbers<[1], [0], [0], [1], [0, 0, 1, 1], [], []>} : vector<128x8xf32>, vector<8x128xf32>, vector<128x128xf32> -> vector<128x128xf32>
    %c0_3 = arith.constant 0 : index
    %c0_4 = arith.constant 0 : index
    %3 = vector.load %arg3[%c0_3, %c0_4] : memref<128x128xf32, #tpu.memory_space<vmem>>, vector<128x128xf32>
    tpu.vector_store %arg3[%c0_3, %c0_4], %2 {strides = array<i32>} : memref<128x128xf32, #tpu.memory_space<vmem>>, vector<128x128xf32>,
    return
  }
  func.func @transform_0(%arg0: i32) -> (i32, i32) {
    %c0_i32 = arith.constant 0 : i32
    %c0_i32_0 = arith.constant 0 : i32
    return %arg0, %c0_i32 : i32, i32
  }
  func.func @transform_1(%arg0: i32) -> (i32, i32) {
    %c0_i32 = arith.constant 0 : i32
    %c0_i32_0 = arith.constant 0 : i32
    %c0_i32_1 = arith.constant 0 : i32
    return %c0_i32, %c0_i32_0 : i32, i32
  }
  func.func @transform_2(%arg0: i32) -> (i32, i32) {
    %c0_i32 = arith.constant 0 : i32
    %c0_i32_0 = arith.constant 0 : i32
    return %arg0, %c0_i32 : i32, i32
  }
}

</mosaic_0001>

<llo_original>
// kernel: tpu_custom_call.1
$region0: #{tpu_custom_call.1}
  #allocation0 [shape = 'u32[]', space=smem, size = 0x4, offset = 0x4, fixed_abs, tag = 'smem constant byte address 0x4 - core index']
  #allocation1 [shape = 'u32[72,128]{1,0:T(1,128)}', space=vmem, size = 0x9000, scoped, tag = 'internal scratch']
  %s0 = inlined_call_operand.vmem [shape: f32[128,8], index: 0, kind: input, shape index: {}]
  %s1 = inlined_call_operand.vmem [shape: f32[8,128], index: 1, kind: input, shape index: {}]
  %s2 = inlined_call_operand.hbm [shape: f32[128,128], index: 2, kind: output, shape index: {}]
  %s3 = sld [smem:[#allocation0]]
  $region18: #{tpu_custom_call.1} parent=0
    _
  %s5 = ssub.s32 1, %s3
  %s6 = scalar_select 0, %s5, %s3
  $region1: #{tpu_custom_call.1} parent=0
    #allocation2 [shape = 'u8[65536]{0}', space=vmem, size = 0x10000, scoped, tag = 'output window, operand 0, single buffered']
    #allocation3 [shape = 's32[1]{0}', space=sflag, size = 0x4, scoped, tag = 'scoped memory for tpu_custom_call.1']
    %7 = vsyncpa [#allocation3], 0
    // Predicated region
    $region2: #{tpu_custom_call.1} parent=1 // pred_check
      _
    $region3: #{tpu_custom_call.1} parent=1 // pred_check_branch
      %9 = sbr.rel (0) target = $region5
    $region4: #{tpu_custom_call.1} parent=1 // pred_region
      _
    $region5: #{tpu_custom_call.1} parent=1 // pred_fallthru
      _
    // Predicated region
    $region6: #{tpu_custom_call.1} parent=1 // pred_check
      _
    $region7: #{tpu_custom_call.1} parent=1 // pred_check_branch
      %11 = sbr.rel (0) target = $region9
    $region8: #{tpu_custom_call.1} parent=1 // pred_region
      _
    $region9: #{tpu_custom_call.1} parent=1 // pred_fallthru
      _
    %v12 = vld [vmem:[%s0] sm:$0xff]
    %v13 = vld [vmem:[%s0 + $0x8] sm:$0xff]
    %v14 = vld [vmem:[%s0 + $0x10] sm:$0xff]
    %v15 = vld [vmem:[%s0 + $0x18] sm:$0xff]
    %v16 = vld [vmem:[%s0 + $0x20] sm:$0xff]
    %v17 = vld [vmem:[%s0 + $0x28] sm:$0xff]
    %v18 = vld [vmem:[%s0 + $0x30] sm:$0xff]
    %v19 = vld [vmem:[%s0 + $0x38] sm:$0xff]
    %v20 = vld [vmem:[%s0 + $0x40] sm:$0xff]
    %v21 = vld [vmem:[%s0 + $0x48] sm:$0xff]
    %v22 = vld [vmem:[%s0 + $0x50] sm:$0xff]
    %v23 = vld [vmem:[%s0 + $0x58] sm:$0xff]
    %v24 = vld [vmem:[%s0 + $0x60] sm:$0xff]
    %v25 = vld [vmem:[%s0 + $0x68] sm:$0xff]
    %v26 = vld [vmem:[%s0 + $0x70] sm:$0xff]
    %v27 = vld [vmem:[%s0 + $0x78] sm:$0xff]
    %v28 = vld [vmem:[%s1] sm:$0xff]
    %vm29 = vcmask 64512
    %v31 = vsel %vm29, %v12, 0
    %v34 = vsel %vm29, %v13, 0
    %v37 = vsel %vm29, %v14, 0
    %v40 = vsel %vm29, %v15, 0
    %v43 = vsel %vm29, %v16, 0
    %v46 = vsel %vm29, %v17, 0
    %v49 = vsel %vm29, %v18, 0
    %v52 = vsel %vm29, %v19, 0
    %v55 = vsel %vm29, %v20, 0
    %v58 = vsel %vm29, %v21, 0
    %v61 = vsel %vm29, %v22, 0
    %v64 = vsel %vm29, %v23, 0
    %v67 = vsel %vm29, %v24, 0
    %v70 = vsel %vm29, %v25, 0
    %v73 = vsel %vm29, %v26, 0
    %v76 = vsel %vm29, %v27, 0
    %78 = vmatpush.msra.mxu0 0.0
    %79 = vmatpush.msra.mxu0 0.0
    %80 = vmatpush.msra.mxu0 0.0
    %81 = vmatpush.msra.mxu0 0.0
    %82 = vmatpush.msra.mxu0 0.0
    %83 = vmatpush.msra.mxu0 0.0
    %84 = vmatpush.msra.mxu0 0.0
    %85 = vmatpush.msra.mxu0 0.0
    %86 = vmatpush.msra.mxu0 0.0
    %87 = vmatpush.msra.mxu0 0.0
    %88 = vmatpush.msra.mxu0 0.0
    %89 = vmatpush.msra.mxu0 0.0
    %90 = vmatpush.msra.mxu0 0.0
    %91 = vmatpush.msra.mxu0 0.0
    %92 = vmatpush.msra.mxu0 0.0
    %93 = vmatpush.msra.mxu0 %v28
    %94 = vmatmul.f32.gmra.mxu0 %v31
    %v95 = vpop.f32.mrf.mxu0
    %v96 = vadd.f32 0.0, %v95
    %97 = vmatmul.f32.gmra.mxu0 %v34
    %v98 = vpop.f32.mrf.mxu0
    %v99 = vadd.f32 0.0, %v98
    %100 = vmatmul.f32.gmra.mxu0 %v37
    %v101 = vpop.f32.mrf.mxu0
    %v102 = vadd.f32 0.0, %v101
    %103 = vmatmul.f32.gmra.mxu0 %v40
    %v104 = vpop.f32.mrf.mxu0
    %v105 = vadd.f32 0.0, %v104
    %106 = vmatmul.f32.gmra.mxu0 %v43
    %v107 = vpop.f32.mrf.mxu0
    %v108 = vadd.f32 0.0, %v107
    %109 = vmatmul.f32.gmra.mxu0 %v46
    %v110 = vpop.f32.mrf.mxu0
    %v111 = vadd.f32 0.0, %v110
    %112 = vmatmul.f32.gmra.mxu0 %v49
    %v113 = vpop.f32.mrf.mxu0
    %v114 = vadd.f32 0.0, %v113
    %115 = vmatmul.f32.gmra.mxu0 %v52
    %v116 = vpop.f32.mrf.mxu0
    %v117 = vadd.f32 0.0, %v116
    %118 = vmatmul.f32.gmra.mxu0 %v55
    %v119 = vpop.f32.mrf.mxu0
    %v120 = vadd.f32 0.0, %v119
    %121 = vmatmul.f32.gmra.mxu0 %v58
    %v122 = vpop.f32.mrf.mxu0
    %v123 = vadd.f32 0.0, %v122
    %124 = vmatmul.f32.gmra.mxu0 %v61
    %v125 = vpop.f32.mrf.mxu0
    %v126 = vadd.f32 0.0, %v125
    %127 = vmatmul.f32.gmra.mxu0 %v64
    %v128 = vpop.f32.mrf.mxu0
    %v129 = vadd.f32 0.0, %v128
    %130 = vmatmul.f32.gmra.mxu0 %v67
    %v131 = vpop.f32.mrf.mxu0
    %v132 = vadd.f32 0.0, %v131
    %133 = vmatmul.f32.gmra.mxu0 %v70
    %v134 = vpop.f32.mrf.mxu0
    %v135 = vadd.f32 0.0, %v134
    %136 = vmatmul.f32.gmra.mxu0 %v73
    %v137 = vpop.f32.mrf.mxu0
    %v138 = vadd.f32 0.0, %v137
    %139 = vmatmul.f32.gmra.mxu0 %v76
    %v140 = vpop.f32.mrf.mxu0
    %v141 = vadd.f32 0.0, %v140
    %142 = vdwg.mxu0
    %143 = vst [vmem:[#allocation2] sm:$0xff] %v96
    %144 = vst [vmem:[#allocation2 + $0x8] sm:$0xff] %v99
    %145 = vst [vmem:[#allocation2 + $0x10] sm:$0xff] %v102
    %146 = vst [vmem:[#allocation2 + $0x18] sm:$0xff] %v105
    %147 = vst [vmem:[#allocation2 + $0x20] sm:$0xff] %v108
    %148 = vst [vmem:[#allocation2 + $0x28] sm:$0xff] %v111
    %149 = vst [vmem:[#allocation2 + $0x30] sm:$0xff] %v114
    %150 = vst [vmem:[#allocation2 + $0x38] sm:$0xff] %v117
    %151 = vst [vmem:[#allocation2 + $0x40] sm:$0xff] %v120
    %152 = vst [vmem:[#allocation2 + $0x48] sm:$0xff] %v123
    %153 = vst [vmem:[#allocation2 + $0x50] sm:$0xff] %v126
    %154 = vst [vmem:[#allocation2 + $0x58] sm:$0xff] %v129
    %155 = vst [vmem:[#allocation2 + $0x60] sm:$0xff] %v132
    %156 = vst [vmem:[#allocation2 + $0x68] sm:$0xff] %v135
    %157 = vst [vmem:[#allocation2 + $0x70] sm:$0xff] %v138
    %158 = vst [vmem:[#allocation2 + $0x78] sm:$0xff] %v141
    // Predicated region
    $region10: #{tpu_custom_call.1} parent=1 // pred_check
      _
    $region11: #{tpu_custom_call.1} parent=1 // pred_check_branch
      %160 = sbr.rel (0) target = $region13
    $region12: #{tpu_custom_call.1} parent=1 // pred_region
      %162 = vsyncadd [#allocation3], 0
      %s163 = sshll.u32 [#allocation2], 4
      %s164 = int_to_ptr.vmem [resolvable:$true] %s163
      %s165 = sshll.u32 %s2, 4
      %s166 = int_to_ptr.hbm [resolvable:$true] %s165
      %171 = dma.vmem_to_hbm [thread:$0]  %s164, 2048, %s166, [#allocation3], 128, 128, 8
    $region13: #{tpu_custom_call.1} parent=1 // pred_fallthru
      _
    // Predicated region
    $region14: #{tpu_custom_call.1} parent=1 // pred_check
      _
    $region15: #{tpu_custom_call.1} parent=1 // pred_check_branch
      %173 = sbr.rel (0) target = $region17
    $region16: #{tpu_custom_call.1} parent=1 // pred_region
      %175 = dma.done [#allocation3], 2048
    $region17: #{tpu_custom_call.1} parent=1 // pred_fallthru
      _
    %176 = vsyncpa [#allocation3], 1

</llo_original>
